<compile_context>
chip_gen: v7x
topology: tpu7x:2x2x1
jax: 0.10.0
libtpu: 0.0.40
codegen_flags: <defaults>
</compile_context>

<pallas_src>
import functools

import jax
import jax.numpy as jnp
from jax import lax
from jax.experimental import pallas as pl
from jax.experimental.pallas import tpu as pltpu


def _round_up(x, m):
    return ((x + m - 1) // m) * m


def _supcon_kernel(anchor_ref, contrast_ref, lab_row_ref, lab_col_ref,
                   inv_cnt_ref, out_ref, *, inv_temp, loss_scale,
                   n_valid_rows, n_valid_cols, tile_m):
    # anchor_ref:   (TILE_M, Dp)  bf16   current tile of anchors
    # contrast_ref: (N_pad,  Dp)  bf16   full contrast slab (VMEM-resident)
    # lab_row_ref:  (TILE_M, 1)   int32  label-ids of this tile's anchors
    # lab_col_ref:  (1, N_pad)    int32  label-ids of all contrast samples
    # inv_cnt_ref:  (TILE_M, 1)   f32    1 / (#positive pairs) per anchor row
    # out_ref:      (TILE_M, 1)   f32    per-anchor loss (0 for padded rows)
    row_start = pl.program_id(0) * tile_m

    a = anchor_ref[...]      # bf16
    c = contrast_ref[...]    # bf16

    # anchor_dot_contrast = (anchor @ contrast.T) / temperature
    # Contract the feature axis of both operands directly (no explicit
    # transpose); bf16 inputs, f32 accumulation on the MXU.
    adc = lax.dot_general(
        a, c,
        dimension_numbers=(((1,), (1,)), ((), ())),
        preferred_element_type=jnp.float32) * inv_temp        # (TILE_M, N_pad)

    tm, np_ = adc.shape
    col = lax.broadcasted_iota(jnp.int32, (tm, np_), 1)
    row = lax.broadcasted_iota(jnp.int32, (tm, np_), 0) + row_start

    col_valid = col < n_valid_cols     # exclude zero-padded contrast columns
    is_self = row == col               # logits_mask (diagonal removal)

    neg_big = jnp.float32(-1e30)

    # Numerical stabilization (cancels exactly in log_prob, matches torch).
    row_max = jnp.max(jnp.where(col_valid, adc, neg_big), axis=1, keepdims=True)
    logits = adc - row_max

    # exp-sum excludes self and padded columns; log_prob uses UNmasked logits.
    exp_arg = jnp.where(col_valid & (~is_self), logits, neg_big)
    denom = jnp.sum(jnp.exp(exp_arg), axis=1, keepdims=True)
    log_prob = logits - jnp.log(denom)                        # (TILE_M, N_pad)

    # Positive-pair mask from label ids (no NxN mask data moved from HBM).
    lid_row = lab_row_ref[...]                                # (TILE_M, 1)
    lid_col = lab_col_ref[...]                                # (1, N_pad)
    pos = (lid_row == lid_col) & (~is_self) & col_valid
    pos_sum = jnp.sum(jnp.where(pos, log_prob, 0.0), axis=1, keepdims=True)

    mean_log_prob_pos = pos_sum * inv_cnt_ref[...]            # (TILE_M, 1)
    per_row_loss = loss_scale * mean_log_prob_pos             # -(T/base_T)*mlpp

    # Zero-out padded anchor rows so the wrapper can just sum / n_anchor.
    row1 = lax.broadcasted_iota(jnp.int32, (tm, 1), 0) + row_start
    out_ref[...] = jnp.where(row1 < n_valid_rows, per_row_loss, 0.0)


def supcon_loss(features, labels=None, mask=None, temperature=0.07,
                contrast_mode="all", base_temperature=0.07, tile_m=128):
    """JAX/Pallas equivalent of SupConLoss.forward."""
    if features.ndim < 3:
        raise ValueError("`features` needs to be [bsz, n_views, ...]")
    if features.ndim > 3:
        features = features.reshape(features.shape[0], features.shape[1], -1)
    if labels is not None and mask is not None:
        raise ValueError("Cannot define both `labels` and `mask`")
    if mask is not None:
        # TODO(synk): explicit (possibly asymmetric) [bsz, bsz] mask argument
        # not supported by the optimized (mask-free, label-id) kernel path.
        raise NotImplementedError("explicit `mask` argument not implemented")
    if contrast_mode not in ("all", "one"):
        raise ValueError("Unknown mode: {}".format(contrast_mode))

    bsz, n_views, dim = features.shape
    n = bsz * n_views
    n_anchor = n if contrast_mode == "all" else bsz

    # torch.cat(torch.unbind(features, dim=1), dim=0): row v*bsz + s = features[s, v]
    cf = jnp.transpose(features, (1, 0, 2)).reshape(n, dim).astype(jnp.float32)

    # Pad feature dim to a lane-dense multiple of 128, rows to a tile multiple.
    d_pad = _round_up(max(dim, 128), 128)
    n_pad = _round_up(n, tile_m)
    cf = jnp.pad(cf, ((0, n_pad - n), (0, d_pad - dim)))
    cf_bf16 = cf.astype(jnp.bfloat16)   # halves DMA; f32 accumulation in-kernel

    # Label ids per stacked sample + per-row positive-pair reciprocal counts.
    if labels is None:
        lid = (jnp.arange(n, dtype=jnp.int32) % bsz)
        inv_cnt = jnp.full((n,), 1.0, jnp.float32) / jnp.float32(n_views - 1)
    else:
        lab = jnp.asarray(labels).reshape(-1).astype(jnp.int32)
        if lab.shape[0] != bsz:
            raise ValueError("Num of labels does not match num of features")
        lid = jnp.tile(lab, n_views)
        same_cnt = jnp.sum((lab[:, None] == lab[None, :]).astype(jnp.float32),
                           axis=1)                           # (bsz,) incl. self
        pos_cnt = jnp.float32(n_views) * jnp.tile(same_cnt, n_views) - 1.0
        inv_cnt = 1.0 / pos_cnt   # 0 positives -> inf -> NaN, same as torch 0/0

    lid_pad = jnp.pad(lid, (0, n_pad - n), constant_values=-1)
    inv_cnt_pad = jnp.pad(inv_cnt, (0, n_pad - n))

    lab_row = lid_pad.reshape(n_pad, 1)
    lab_col = lid_pad.reshape(1, n_pad)
    inv_cnt_col = inv_cnt_pad.reshape(n_pad, 1).astype(jnp.float32)

    kernel = functools.partial(
        _supcon_kernel,
        inv_temp=float(1.0 / temperature),
        loss_scale=float(-(temperature / base_temperature)),
        n_valid_rows=n_anchor,
        n_valid_cols=n,
        tile_m=tile_m,
    )

    # In 'one' mode the anchors are exactly the first `bsz` rows of the
    # contrast slab, so we just iterate fewer row tiles of the same arrays.
    n_anchor_pad = _round_up(n_anchor, tile_m)
    num_tiles = n_anchor_pad // tile_m

    per_row = pl.pallas_call(
        kernel,
        out_shape=jax.ShapeDtypeStruct((n_anchor_pad, 1), jnp.float32),
        grid_spec=pltpu.PrefetchScalarGridSpec(
            num_scalar_prefetch=0,
            grid=(num_tiles,),
            in_specs=[
                pl.BlockSpec((tile_m, d_pad), lambda i: (i, 0)),   # anchor tile
                pl.BlockSpec((n_pad, d_pad), lambda i: (0, 0)),    # contrast slab
                pl.BlockSpec((tile_m, 1), lambda i: (i, 0)),       # row label ids
                pl.BlockSpec((1, n_pad), lambda i: (0, 0)),        # col label ids
                pl.BlockSpec((tile_m, 1), lambda i: (i, 0)),       # 1/pos-count
            ],
            out_specs=pl.BlockSpec((tile_m, 1), lambda i: (i, 0)),
        ),
        compiler_params=pltpu.CompilerParams(
            dimension_semantics=("parallel",),
            vmem_limit_bytes=64 * 1024 * 1024,
        ),
    )(cf_bf16, cf_bf16, lab_row, lab_col, inv_cnt_col)

    # loss.view(anchor_count, batch_size).mean() == mean over n_anchor rows.
    return jnp.sum(per_row) / jnp.float32(n_anchor)


def _supcon_loss_ref(features, labels=None, temperature=0.07,
                     contrast_mode="all", base_temperature=0.07,
                     cast_bf16=True):
    """Pure-JAX reference mirroring the PyTorch code.

    `cast_bf16` mirrors the kernel's bf16 matmul inputs (f32 accumulation) so
    the comparison tolerance can stay tight.
    """
    feats = features.reshape(features.shape[0], features.shape[1], -1)
    feats = feats.astype(jnp.float32)
    if cast_bf16:
        feats = feats.astype(jnp.bfloat16).astype(jnp.float32)
    bsz, n_views = feats.shape[0], feats.shape[1]
    cf = jnp.transpose(feats, (1, 0, 2)).reshape(bsz * n_views, -1)
    n = bsz * n_views
    if contrast_mode == "one":
        anchor = feats[:, 0]
        anchor_count = 1
    else:
        anchor = cf
        anchor_count = n_views
    n_anchor = anchor_count * bsz
    adc = (anchor @ cf.T) / temperature
    adc = adc - jnp.max(adc, axis=1, keepdims=True)
    logits_mask = jnp.ones((n_anchor, n), jnp.float32)
    logits_mask = logits_mask.at[jnp.arange(n_anchor), jnp.arange(n_anchor)].set(0.0)
    if labels is None:
        base = jnp.eye(bsz, dtype=jnp.float32)
    else:
        lab = jnp.asarray(labels).reshape(-1)
        base = (lab[:, None] == lab[None, :]).astype(jnp.float32)
    mask = jnp.tile(base, (anchor_count, n_views)) * logits_mask
    exp_logits = jnp.exp(adc) * logits_mask
    log_prob = adc - jnp.log(jnp.sum(exp_logits, axis=1, keepdims=True))
    mlpp = jnp.sum(mask * log_prob, axis=1) / jnp.sum(mask, axis=1)
    return jnp.mean(-(temperature / base_temperature) * mlpp)


if __name__ == "__main__":
    key = jax.random.PRNGKey(0)
    bsz, n_views, dim = 8, 2, 32
    features = jax.random.normal(key, (bsz, n_views, dim), dtype=jnp.float32)
    # L2-normalize per sample (typical SupCon usage; semantics unchanged).
    features = features / jnp.linalg.norm(features, axis=-1, keepdims=True)

    # Unsupervised (SimCLR) case: labels=None, contrast_mode='all'.
    loss = jax.block_until_ready(supcon_loss(features))
    ref = _supcon_loss_ref(features)
    assert jnp.allclose(loss, ref, atol=1e-4, rtol=1e-4), (loss, ref)

    # Supervised case: integer class labels.
    labels = jnp.array([0, 1, 0, 1, 2, 2, 3, 3], dtype=jnp.int32)
    loss_l = jax.block_until_ready(supcon_loss(features, labels=labels))
    ref_l = _supcon_loss_ref(features, labels=labels)
    assert jnp.allclose(loss_l, ref_l, atol=1e-4, rtol=1e-4), (loss_l, ref_l)

    # Supervised case, contrast_mode='one' (anchor = first view only).
    loss_o = jax.block_until_ready(
        supcon_loss(features, labels=labels, contrast_mode="one"))
    ref_o = _supcon_loss_ref(features, labels=labels, contrast_mode="one")
    assert jnp.allclose(loss_o, ref_o, atol=1e-4, rtol=1e-4), (loss_o, ref_o)

    print("KERNEL_OK")
</pallas_src>

<mosaic_0001>
module attributes {stable_mosaic.version = 11 : i64} {
  func.func @_supcon_kernel(%arg0: i32, %arg1: memref<128x128xbf16, #tpu.memory_space<vmem>>, %arg2: memref<128x128xbf16, #tpu.memory_space<vmem>>, %arg3: memref<128x1xi32, #tpu.memory_space<vmem>>, %arg4: memref<1x128xi32, #tpu.memory_space<vmem>>, %arg5: memref<128x1xf32, #tpu.memory_space<vmem>>, %arg6: memref<128x1xf32, #tpu.memory_space<vmem>>) attributes {dimension_semantics = [#tpu.dimension_semantics<parallel>], iteration_bounds = array<i64: 1>, scalar_prefetch = 0 : i64, scratch_operands = 0 : i64, tpu.core_type = #tpu.core_type<tc>, window_params = [{transform_indices = @transform_0, window_bounds = array<i64: 128, 128>}, {pipeline_mode = #tpu.pipeline_mode<synchronous>, transform_indices = @transform_1, window_bounds = array<i64: 128, 128>}, {transform_indices = @transform_2, window_bounds = array<i64: 128, 1>}, {pipeline_mode = #tpu.pipeline_mode<synchronous>, transform_indices = @transform_3, window_bounds = array<i64: 1, 128>}, {transform_indices = @transform_4, window_bounds = array<i64: 128, 1>}, {transform_indices = @transform_5, window_bounds = array<i64: 128, 1>}]} {
    %c128_i32 = arith.constant 128 : i32
    %0 = arith.muli %arg0, %c128_i32 : i32
    %c0 = arith.constant 0 : index
    %c0_0 = arith.constant 0 : index
    %1 = vector.load %arg1[%c0, %c0_0] : memref<128x128xbf16, #tpu.memory_space<vmem>>, vector<128x128xbf16>
    %c0_1 = arith.constant 0 : index
    %c0_2 = arith.constant 0 : index
    %2 = vector.load %arg2[%c0_1, %c0_2] : memref<128x128xbf16, #tpu.memory_space<vmem>>, vector<128x128xbf16>
    %cst = arith.constant dense<0.000000e+00> : vector<128x128xf32>
    %3 = tpu.matmul %1, %2, %cst {dimension_numbers = #tpu.dot_dimension_numbers<[1], [1], [0], [0], [0, 0, 1, 0], [], []>} : vector<128x128xbf16>, vector<128x128xbf16>, vector<128x128xf32> -> vector<128x128xf32>
    %cst_3 = arith.constant 14.2857141 : f32
    %4 = vector.broadcast %cst_3 : f32 to vector<128x128xf32>
    %5 = arith.mulf %3, %4 : vector<128x128xf32>
    %6 = tpu.iota {dimensions = array<i32: 1>} : vector<128x128xi32>
    %7 = tpu.iota {dimensions = array<i32: 0>} : vector<128x128xi32>
    %8 = vector.broadcast %0 : i32 to vector<128x128xi32>
    %9 = arith.addi %7, %8 : vector<128x128xi32>
    %c16_i32 = arith.constant 16 : i32
    %10 = vector.broadcast %c16_i32 : i32 to vector<128x128xi32>
    %11 = arith.cmpi slt, %6, %10 : vector<128x128xi32>
    %12 = arith.cmpi eq, %9, %6 : vector<128x128xi32>
    %cst_4 = arith.constant -1.000000e+30 : f32
    %13 = vector.broadcast %cst_4 : f32 to vector<128x128xf32>
    %14 = arith.select %11, %5, %13 : vector<128x128xi1>, vector<128x128xf32>
    %cst_5 = arith.constant dense<0xFF800000> : vector<128xf32>
    %15 = vector.multi_reduction <maximumf>, %14, %cst_5 [1] : vector<128x128xf32> to vector<128xf32>
    %16 = vector.shape_cast %15 : vector<128xf32> to vector<128x1xf32>
    %17 = vector.broadcast %16 : vector<128x1xf32> to vector<128x128xf32>
    %18 = arith.subf %5, %17 : vector<128x128xf32>
    %cst_6 = arith.constant dense<true> : vector<128x128xi1>
    %19 = arith.xori %12, %cst_6 : vector<128x128xi1>
    %20 = arith.andi %11, %19 : vector<128x128xi1>
    %cst_7 = arith.constant -1.000000e+30 : f32
    %21 = vector.broadcast %cst_7 : f32 to vector<128x128xf32>
    %22 = arith.select %20, %18, %21 : vector<128x128xi1>, vector<128x128xf32>
    %23 = math.exp %22 : vector<128x128xf32>
    %cst_8 = arith.constant dense<0.000000e+00> : vector<128xf32>
    %24 = vector.multi_reduction <add>, %23, %cst_8 [1] : vector<128x128xf32> to vector<128xf32>
    %25 = vector.shape_cast %24 : vector<128xf32> to vector<128x1xf32>
    %26 = math.log %25 : vector<128x1xf32>
    %27 = vector.broadcast %26 : vector<128x1xf32> to vector<128x128xf32>
    %28 = arith.subf %18, %27 : vector<128x128xf32>
    %c0_9 = arith.constant 0 : index
    %c0_10 = arith.constant 0 : index
    %29 = vector.load %arg3[%c0_9, %c0_10] : memref<128x1xi32, #tpu.memory_space<vmem>>, vector<128x1xi32>
    %c0_11 = arith.constant 0 : index
    %c0_12 = arith.constant 0 : index
    %30 = vector.load %arg4[%c0_11, %c0_12] : memref<1x128xi32, #tpu.memory_space<vmem>>, vector<1x128xi32>
    %31 = vector.broadcast %29 : vector<128x1xi32> to vector<128x128xi32>
    %32 = vector.broadcast %30 : vector<1x128xi32> to vector<128x128xi32>
    %33 = arith.cmpi eq, %31, %32 : vector<128x128xi32>
    %cst_13 = arith.constant dense<true> : vector<128x128xi1>
    %34 = arith.xori %12, %cst_13 : vector<128x128xi1>
    %35 = arith.andi %33, %34 : vector<128x128xi1>
    %36 = arith.andi %35, %11 : vector<128x128xi1>
    %cst_14 = arith.constant 0.000000e+00 : f32
    %37 = vector.broadcast %cst_14 : f32 to vector<128x128xf32>
    %38 = arith.select %36, %28, %37 : vector<128x128xi1>, vector<128x128xf32>
    %cst_15 = arith.constant dense<0.000000e+00> : vector<128xf32>
    %39 = vector.multi_reduction <add>, %38, %cst_15 [1] : vector<128x128xf32> to vector<128xf32>
    %40 = vector.shape_cast %39 : vector<128xf32> to vector<128x1xf32>
    %c0_16 = arith.constant 0 : index
    %c0_17 = arith.constant 0 : index
    %41 = vector.load %arg5[%c0_16, %c0_17] : memref<128x1xf32, #tpu.memory_space<vmem>>, vector<128x1xf32>
    %42 = arith.mulf %40, %41 : vector<128x1xf32>
    %cst_18 = arith.constant -1.000000e+00 : f32
    %43 = vector.broadcast %cst_18 : f32 to vector<128x1xf32>
    %44 = arith.mulf %43, %42 : vector<128x1xf32>
    %45 = tpu.iota {dimensions = array<i32: 0>} : vector<128x1xi32>
    %46 = vector.broadcast %0 : i32 to vector<128x1xi32>
    %47 = arith.addi %45, %46 : vector<128x1xi32>
    %c16_i32_19 = arith.constant 16 : i32
    %48 = vector.broadcast %c16_i32_19 : i32 to vector<128x1xi32>
    %49 = arith.cmpi slt, %47, %48 : vector<128x1xi32>
    %cst_20 = arith.constant 0.000000e+00 : f32
    %50 = vector.broadcast %cst_20 : f32 to vector<128x1xf32>
    %51 = arith.select %49, %44, %50 : vector<128x1xi1>, vector<128x1xf32>
    %c0_21 = arith.constant 0 : index
    %c0_22 = arith.constant 0 : index
    %52 = vector.load %arg6[%c0_21, %c0_22] : memref<128x1xf32, #tpu.memory_space<vmem>>, vector<128x1xf32>
    tpu.vector_store %arg6[%c0_21, %c0_22], %51 {strides = array<i32>} : memref<128x1xf32, #tpu.memory_space<vmem>>, vector<128x1xf32>,
    return
  }
  func.func @transform_0(%arg0: i32) -> (i32, i32) {
    %c0_i32 = arith.constant 0 : i32
    %c0_i32_0 = arith.constant 0 : i32
    return %arg0, %c0_i32 : i32, i32
  }
  func.func @transform_1(%arg0: i32) -> (i32, i32) {
    %c0_i32 = arith.constant 0 : i32
    %c0_i32_0 = arith.constant 0 : i32
    %c0_i32_1 = arith.constant 0 : i32
    return %c0_i32, %c0_i32_0 : i32, i32
  }
  func.func @transform_2(%arg0: i32) -> (i32, i32) {
    %c0_i32 = arith.constant 0 : i32
    %c0_i32_0 = arith.constant 0 : i32
    return %arg0, %c0_i32 : i32, i32
  }
  func.func @transform_3(%arg0: i32) -> (i32, i32) {
    %c0_i32 = arith.constant 0 : i32
    %c0_i32_0 = arith.constant 0 : i32
    %c0_i32_1 = arith.constant 0 : i32
    return %c0_i32, %c0_i32_0 : i32, i32
  }
  func.func @transform_4(%arg0: i32) -> (i32, i32) {
    %c0_i32 = arith.constant 0 : i32
    %c0_i32_0 = arith.constant 0 : i32
    return %arg0, %c0_i32 : i32, i32
  }
  func.func @transform_5(%arg0: i32) -> (i32, i32) {
    %c0_i32 = arith.constant 0 : i32
    %c0_i32_0 = arith.constant 0 : i32
    return %arg0, %c0_i32 : i32, i32
  }
}

</mosaic_0001>

<llo_original>
// kernel: tpu_custom_call.1
$region0: #{tpu_custom_call.1}
  #allocation0 [shape = 'u32[]', space=smem, size = 0x4, offset = 0x4, fixed_abs, tag = 'smem constant byte address 0x4 - core index']
  #allocation1 [shape = 'u32[144,128]{1,0:T(1,128)}', space=vmem, size = 0x12000, scoped, tag = 'internal scratch']
  %s0 = inlined_call_operand.hbm [shape: bf16[128,128], index: 0, kind: input, shape index: {}]
  %s1 = inlined_call_operand.hbm [shape: bf16[128,128], index: 1, kind: input, shape index: {}]
  %s2 = inlined_call_operand.hbm [shape: s32[128,1], index: 2, kind: input, shape index: {}]
  %s3 = inlined_call_operand.hbm [shape: s32[1,128], index: 3, kind: input, shape index: {}]
  %s4 = inlined_call_operand.hbm [shape: f32[128,1], index: 4, kind: input, shape index: {}]
  %s5 = inlined_call_operand.hbm [shape: f32[128,1], index: 5, kind: output, shape index: {}]
  %s6 = sld [smem:[#allocation0]]
  $region50: #{tpu_custom_call.1} parent=0
    _
  %s8 = ssub.s32 1, %s6
  %s9 = scalar_select 0, %s8, %s6
  $region1: #{tpu_custom_call.1} parent=0
    #allocation2 [shape = 'u8[32768]{0}', space=vmem, size = 0x8000, scoped, tag = 'input window, operand 0, single buffered']
    #allocation3 [shape = 's32[1]{0}', space=sflag, size = 0x4, scoped, tag = 'scoped memory for tpu_custom_call.1']
    #allocation4 [shape = 's32[1]{0}', space=sflag, size = 0x4, scoped, tag = 'scoped memory for tpu_custom_call.1']
    #allocation5 [shape = 'u8[32768]{0}', space=vmem, size = 0x8000, scoped, tag = 'input window, operand 1, single buffered']
    #allocation6 [shape = 's32[1]{0}', space=sflag, size = 0x4, scoped, tag = 'scoped memory for tpu_custom_call.1']
    #allocation7 [shape = 'u8[65536]{0}', space=vmem, size = 0x10000, scoped, tag = 'input window, operand 2, single buffered']
    #allocation8 [shape = 'u8[512]{0}', space=vmem, size = 0x400, scoped, tag = 'input window, operand 3, single buffered']
    #allocation9 [shape = 's32[1]{0}', space=sflag, size = 0x4, scoped, tag = 'scoped memory for tpu_custom_call.1']
    #allocation10 [shape = 'u8[65536]{0}', space=vmem, size = 0x10000, scoped, tag = 'input window, operand 4, single buffered']
    #allocation11 [shape = 'u8[65536]{0}', space=vmem, size = 0x10000, scoped, tag = 'output window, operand 0, single buffered']
    %10 = vsyncpa [#allocation3], 0
    %11 = vsyncpa [#allocation6], 0
    %12 = vsyncpa [#allocation9], 0
    %13 = vsyncpa [#allocation4], 0
    // Predicated region
    $region2: #{tpu_custom_call.1} parent=1 // pred_check
      _
    $region3: #{tpu_custom_call.1} parent=1 // pred_check_branch
      %15 = sbr.rel (0) target = $region5
    $region4: #{tpu_custom_call.1} parent=1 // pred_region
      %s17 = ssub.s32 1024, 1024
      %18 = vsyncadd [#allocation3], %s17
      %s19 = sshll.u32 [#allocation2], 4
      %s20 = int_to_ptr.vmem [resolvable:$true] %s19
      %25 = dma.hbm_to_vmem [thread:$0]  %s0, 1024, %s20, [#allocation3], 64, 64, 4
    $region5: #{tpu_custom_call.1} parent=1 // pred_fallthru
      _
    // Predicated region
    $region6: #{tpu_custom_call.1} parent=1 // pred_check
      _
    $region7: #{tpu_custom_call.1} parent=1 // pred_check_branch
      %27 = sbr.rel (0) target = $region9
    $region8: #{tpu_custom_call.1} parent=1 // pred_region
      %s29 = ssub.s32 1024, 1024
      %30 = vsyncadd [#allocation6], %s29
      %s31 = sshll.u32 [#allocation5], 4
      %s32 = int_to_ptr.vmem [resolvable:$true] %s31
      %37 = dma.hbm_to_vmem [thread:$0]  %s1, 1024, %s32, [#allocation6], 64, 64, 4
    $region9: #{tpu_custom_call.1} parent=1 // pred_fallthru
      _
    // Predicated region
    $region10: #{tpu_custom_call.1} parent=1 // pred_check
      _
    $region11: #{tpu_custom_call.1} parent=1 // pred_check_branch
      %39 = sbr.rel (0) target = $region13
    $region12: #{tpu_custom_call.1} parent=1 // pred_region
      %s41 = ssub.s32 2048, 2048
      %42 = vsyncadd [#allocation6], %s41
      %s43 = sshll.u32 [#allocation7], 4
      %s44 = int_to_ptr.vmem [resolvable:$true] %s43
      %49 = dma.hbm_to_vmem [thread:$0]  %s2, 2048, %s44, [#allocation6], 128, 128, 8
    $region13: #{tpu_custom_call.1} parent=1 // pred_fallthru
      _
    // Predicated region
    $region14: #{tpu_custom_call.1} parent=1 // pred_check
      _
    $region15: #{tpu_custom_call.1} parent=1 // pred_check_branch
      %51 = sbr.rel (0) target = $region17
    $region16: #{tpu_custom_call.1} parent=1 // pred_region
      %s53 = ssub.s32 16, 16
      %54 = vsyncadd [#allocation9], %s53
      %s56 = sshll.u32 [#allocation8], 4
      %s57 = int_to_ptr.vmem [resolvable:$true] %s56
      %59 = dma.hbm_to_vmem [thread:$0]  %s3, 16, %s57, [#allocation9]
    $region17: #{tpu_custom_call.1} parent=1 // pred_fallthru
      _
    // Predicated region
    $region18: #{tpu_custom_call.1} parent=1 // pred_check
      _
    $region19: #{tpu_custom_call.1} parent=1 // pred_check_branch
      %61 = sbr.rel (0) target = $region21
    $region20: #{tpu_custom_call.1} parent=1 // pred_region
      %s63 = ssub.s32 2048, 2048
      %64 = vsyncadd [#allocation9], %s63
      %s65 = sshll.u32 [#allocation10], 4
      %s66 = int_to_ptr.vmem [resolvable:$true] %s65
      %71 = dma.hbm_to_vmem [thread:$0]  %s4, 2048, %s66, [#allocation9], 128, 128, 8
    $region21: #{tpu_custom_call.1} parent=1 // pred_fallthru
      _
    // Predicated region
    $region22: #{tpu_custom_call.1} parent=1 // pred_check
      _
    $region23: #{tpu_custom_call.1} parent=1 // pred_check_branch
      %73 = sbr.rel (0) target = $region25
    $region24: #{tpu_custom_call.1} parent=1 // pred_region
      %74 = dma.done [#allocation3], 1024
    $region25: #{tpu_custom_call.1} parent=1 // pred_fallthru
      _
    // Predicated region
    $region26: #{tpu_custom_call.1} parent=1 // pred_check
      _
    $region27: #{tpu_custom_call.1} parent=1 // pred_check_branch
      %76 = sbr.rel (0) target = $region29
    $region28: #{tpu_custom_call.1} parent=1 // pred_region
      %77 = dma.done [#allocation6], 1024
    $region29: #{tpu_custom_call.1} parent=1 // pred_fallthru
      _
    // Predicated region
    $region30: #{tpu_custom_call.1} parent=1 // pred_check
      _
    $region31: #{tpu_custom_call.1} parent=1 // pred_check_branch
      %79 = sbr.rel (0) target = $region33
    $region32: #{tpu_custom_call.1} parent=1 // pred_region
      %80 = dma.done [#allocation6], 2048
    $region33: #{tpu_custom_call.1} parent=1 // pred_fallthru
      _
    // Predicated region
    $region34: #{tpu_custom_call.1} parent=1 // pred_check
      _
    $region35: #{tpu_custom_call.1} parent=1 // pred_check_branch
      %82 = sbr.rel (0) target = $region37
    $region36: #{tpu_custom_call.1} parent=1 // pred_region
      %83 = dma.done [#allocation9], 16
    $region37: #{tpu_custom_call.1} parent=1 // pred_fallthru
      _
    // Predicated region
    $region38: #{tpu_custom_call.1} parent=1 // pred_check
      _
    $region39: #{tpu_custom_call.1} parent=1 // pred_check_branch
      %85 = sbr.rel (0) target = $region41
    $region40: #{tpu_custom_call.1} parent=1 // pred_region
      %86 = dma.done [#allocation9], 2048
    $region41: #{tpu_custom_call.1} parent=1 // pred_fallthru
      _
    %s88 = smul.u32 0, 128
    %v89 = vld [vmem:[#allocation2] sm:$0xf]
    %v90 = vld [vmem:[#allocation2 + $0x4] sm:$0xf]
    %v91 = vld [vmem:[#allocation2 + $0x8] sm:$0xf]
    %v92 = vld [vmem:[#allocation2 + $0xc] sm:$0xf]
    %v93 = vld [vmem:[#allocation2 + $0x10] sm:$0xf]
    %v94 = vld [vmem:[#allocation2 + $0x14] sm:$0xf]
    %v95 = vld [vmem:[#allocation2 + $0x18] sm:$0xf]
    %v96 = vld [vmem:[#allocation2 + $0x1c] sm:$0xf]
    %v97 = vld [vmem:[#allocation2 + $0x20] sm:$0xf]
    %v98 = vld [vmem:[#allocation2 + $0x24] sm:$0xf]
    %v99 = vld [vmem:[#allocation2 + $0x28] sm:$0xf]
    %v100 = vld [vmem:[#allocation2 + $0x2c] sm:$0xf]
    %v101 = vld [vmem:[#allocation2 + $0x30] sm:$0xf]
    %v102 = vld [vmem:[#allocation2 + $0x34] sm:$0xf]
    %v103 = vld [vmem:[#allocation2 + $0x38] sm:$0xf]
    %v104 = vld [vmem:[#allocation2 + $0x3c] sm:$0xf]
    %v105 = vld [vmem:[#allocation5] sm:$0xf]
    %v106 = vld [vmem:[#allocation5 + $0x4] sm:$0xf]
    %v107 = vld [vmem:[#allocation5 + $0x8] sm:$0xf]
    %v108 = vld [vmem:[#allocation5 + $0xc] sm:$0xf]
    %v109 = vld [vmem:[#allocation5 + $0x10] sm:$0xf]
    %v110 = vld [vmem:[#allocation5 + $0x14] sm:$0xf]
    %v111 = vld [vmem:[#allocation5 + $0x18] sm:$0xf]
    %v112 = vld [vmem:[#allocation5 + $0x1c] sm:$0xf]
    %v113 = vld [vmem:[#allocation5 + $0x20] sm:$0xf]
    %v114 = vld [vmem:[#allocation5 + $0x24] sm:$0xf]
    %v115 = vld [vmem:[#allocation5 + $0x28] sm:$0xf]
    %v116 = vld [vmem:[#allocation5 + $0x2c] sm:$0xf]
    %v117 = vld [vmem:[#allocation5 + $0x30] sm:$0xf]
    %v118 = vld [vmem:[#allocation5 + $0x34] sm:$0xf]
    %v119 = vld [vmem:[#allocation5 + $0x38] sm:$0xf]
    %v120 = vld [vmem:[#allocation5 + $0x3c] sm:$0xf]
    %v137 = vunpack.c.l.b16 %v89
    %v138 = vunpack.c.l.b16 %v90
    %v139 = vunpack.c.l.b16 %v91
    %v140 = vunpack.c.l.b16 %v92
    %v141 = vunpack.c.l.b16 %v93
    %v142 = vunpack.c.l.b16 %v94
    %v143 = vunpack.c.l.b16 %v95
    %v144 = vunpack.c.l.b16 %v96
    %v145 = vunpack.c.l.b16 %v97
    %v146 = vunpack.c.l.b16 %v98
    %v147 = vunpack.c.l.b16 %v99
    %v148 = vunpack.c.l.b16 %v100
    %v149 = vunpack.c.l.b16 %v101
    %v150 = vunpack.c.l.b16 %v102
    %v151 = vunpack.c.l.b16 %v103
    %v152 = vunpack.c.l.b16 %v104
    %v153 = vpack.c.b16 %v138, %v137
    %v154 = vpack.c.b16 %v140, %v139
    %v155 = vpack.c.b16 %v142, %v141
    %v156 = vpack.c.b16 %v144, %v143
    %v157 = vpack.c.b16 %v146, %v145
    %v158 = vpack.c.b16 %v148, %v147
    %v159 = vpack.c.b16 %v150, %v149
    %v160 = vpack.c.b16 %v152, %v151
    %v185 = vunpack.c.l.b16 %v105
    %v186 = vunpack.c.l.b16 %v106
    %v187 = vunpack.c.l.b16 %v107
    %v188 = vunpack.c.l.b16 %v108
    %v189 = vunpack.c.l.b16 %v109
    %v190 = vunpack.c.l.b16 %v110
    %v191 = vunpack.c.l.b16 %v111
    %v192 = vunpack.c.l.b16 %v112
    %v193 = vunpack.c.l.b16 %v113
    %v194 = vunpack.c.l.b16 %v114
    %v195 = vunpack.c.l.b16 %v115
    %v196 = vunpack.c.l.b16 %v116
    %v197 = vunpack.c.l.b16 %v117
    %v198 = vunpack.c.l.b16 %v118
    %v199 = vunpack.c.l.b16 %v119
    %v200 = vunpack.c.l.b16 %v120
    %v201 = vpack.c.b16 %v186, %v185
    %v202 = vpack.c.b16 %v188, %v187
    %v203 = vpack.c.b16 %v190, %v189
    %v204 = vpack.c.b16 %v192, %v191
    %v205 = vpack.c.b16 %v194, %v193
    %v206 = vpack.c.b16 %v196, %v195
    %v207 = vpack.c.b16 %v198, %v197
    %v208 = vpack.c.b16 %v200, %v199
    %217 = vmatprep.subr.bf16.mxu0 0
    %218 = vmatpush1.bf16.xpose.msra.mxu0 %v201
    %219 = vmatprep.subr.bf16.mxu0 0
    %220 = vmatpush1.bf16.xpose.msra.mxu0 %v202
    %221 = vmatprep.subr.bf16.mxu0 0
    %222 = vmatpush1.bf16.xpose.msra.mxu0 %v203
    %223 = vmatprep.subr.bf16.mxu0 0
    %224 = vmatpush1.bf16.xpose.msra.mxu0 %v204
    %225 = vmatprep.subr.bf16.mxu0 0
    %226 = vmatpush1.bf16.xpose.msra.mxu0 %v205
    %227 = vmatprep.subr.bf16.mxu0 0
    %228 = vmatpush1.bf16.xpose.msra.mxu0 %v206
    %229 = vmatprep.subr.bf16.mxu0 0
    %230 = vmatpush1.bf16.xpose.msra.mxu0 %v207
    %231 = vmatprep.subr.bf16.mxu0 0
    %232 = vmatpush1.bf16.xpose.msra.mxu0 %v208
    %233 = vmatprep.subr.bf16.mxu0 0
    %234 = vmatpush1.bf16.xpose.msra.mxu0 0
    %235 = vmatprep.subr.bf16.mxu0 0
    %236 = vmatpush1.bf16.xpose.msra.mxu0 0
    %237 = vmatprep.subr.bf16.mxu0 0
    %238 = vmatpush1.bf16.xpose.msra.mxu0 0
    %239 = vmatprep.subr.bf16.mxu0 0
    %240 = vmatpush1.bf16.xpose.msra.mxu0 0
    %241 = vmatprep.subr.bf16.mxu0 0
    %242 = vmatpush1.bf16.xpose.msra.mxu0 0
    %243 = vmatprep.subr.bf16.mxu0 0
    %244 = vmatpush1.bf16.xpose.msra.mxu0 0
    %245 = vmatprep.subr.bf16.mxu0 0
    %246 = vmatpush1.bf16.xpose.msra.mxu0 0
    %247 = vmatprep.subr.bf16.mxu0 0
    %248 = vmatpush1.bf16.xpose.msra.mxu0 0
    %249 = vmatprep.mubr.bf16.mxu0 0
    %250 = vmatmul.mubr.bf16.gmra.mrb[0].mxu0 %v153
    %v251 = vpop.f32.mrb[0].mxu0
    %v252 = vadd.f32 0.0, %v251
    %v253 = vpop.f32.mrb[0].mxu0
    %v254 = vpop.f32.mrb[0].mxu0
    %v255 = vadd.f32 0.0, %v254
    %v256 = vpop.f32.mrb[0].mxu0
    %257 = vmatprep.mubr.bf16.mxu0 0
    %258 = vmatmul.mubr.bf16.gmra.mrb[0].mxu0 %v154
    %v259 = vpop.f32.mrb[0].mxu0
    %v260 = vadd.f32 0.0, %v259
    %v261 = vpop.f32.mrb[0].mxu0
    %v262 = vpop.f32.mrb[0].mxu0
    %v263 = vadd.f32 0.0, %v262
    %v264 = vpop.f32.mrb[0].mxu0
    %265 = vmatprep.mubr.bf16.mxu0 0
    %266 = vmatmul.mubr.bf16.gmra.mrb[0].mxu0 %v155
    %v267 = vpop.f32.mrb[0].mxu0
    %v268 = vadd.f32 0.0, %v267
    %v269 = vpop.f32.mrb[0].mxu0
    %v270 = vpop.f32.mrb[0].mxu0
    %v271 = vadd.f32 0.0, %v270
    %v272 = vpop.f32.mrb[0].mxu0
    %273 = vmatprep.mubr.bf16.mxu0 0
    %274 = vmatmul.mubr.bf16.gmra.mrb[0].mxu0 %v156
    %v275 = vpop.f32.mrb[0].mxu0
    %v276 = vadd.f32 0.0, %v275
    %v277 = vpop.f32.mrb[0].mxu0
    %v278 = vpop.f32.mrb[0].mxu0
    %v279 = vadd.f32 0.0, %v278
    %v280 = vpop.f32.mrb[0].mxu0
    %281 = vmatprep.mubr.bf16.mxu0 0
    %282 = vmatmul.mubr.bf16.gmra.mrb[0].mxu0 %v157
    %v283 = vpop.f32.mrb[0].mxu0
    %v284 = vadd.f32 0.0, %v283
    %v285 = vpop.f32.mrb[0].mxu0
    %v286 = vpop.f32.mrb[0].mxu0
    %v287 = vadd.f32 0.0, %v286
    %v288 = vpop.f32.mrb[0].mxu0
    %289 = vmatprep.mubr.bf16.mxu0 0
    %290 = vmatmul.mubr.bf16.gmra.mrb[0].mxu0 %v158
    %v291 = vpop.f32.mrb[0].mxu0
    %v292 = vadd.f32 0.0, %v291
    %v293 = vpop.f32.mrb[0].mxu0
    %v294 = vpop.f32.mrb[0].mxu0
    %v295 = vadd.f32 0.0, %v294
    %v296 = vpop.f32.mrb[0].mxu0
    %297 = vmatprep.mubr.bf16.mxu0 0
    %298 = vmatmul.mubr.bf16.gmra.mrb[0].mxu0 %v159
    %v299 = vpop.f32.mrb[0].mxu0
    %v300 = vadd.f32 0.0, %v299
    %v301 = vpop.f32.mrb[0].mxu0
    %v302 = vpop.f32.mrb[0].mxu0
    %v303 = vadd.f32 0.0, %v302
    %v304 = vpop.f32.mrb[0].mxu0
    %305 = vmatprep.mubr.bf16.mxu0 0
    %306 = vmatmul.mubr.bf16.gmra.mrb[0].mxu0 %v160
    %v307 = vpop.f32.mrb[0].mxu0
    %v308 = vadd.f32 0.0, %v307
    %v309 = vpop.f32.mrb[0].mxu0
    %v310 = vpop.f32.mrb[0].mxu0
    %v311 = vadd.f32 0.0, %v310
    %v312 = vpop.f32.mrb[0].mxu0
    %313 = vdwg.mxu0
    %v314 = vmul.f32 %v252, 14.285714
    %v315 = vmul.f32 %v255, 14.285714
    %v316 = vmul.f32 %v260, 14.285714
    %v317 = vmul.f32 %v263, 14.285714
    %v318 = vmul.f32 %v268, 14.285714
    %v319 = vmul.f32 %v271, 14.285714
    %v320 = vmul.f32 %v276, 14.285714
    %v321 = vmul.f32 %v279, 14.285714
    %v322 = vmul.f32 %v284, 14.285714
    %v323 = vmul.f32 %v287, 14.285714
    %v324 = vmul.f32 %v292, 14.285714
    %v325 = vmul.f32 %v295, 14.285714
    %v326 = vmul.f32 %v300, 14.285714
    %v327 = vmul.f32 %v303, 14.285714
    %v328 = vmul.f32 %v308, 14.285714
    %v329 = vmul.f32 %v311, 14.285714
    %v330 = vlaneseq
    %v331 = vand.u32 %v330, 127
    %v332 = vlaneseq
    %v333 = vshrl.u32 %v332, 7
    %v334 = vadd.s32 %v333, 8
    %v335 = vadd.s32 %v333, 16
    %v336 = vadd.s32 %v333, 24
    %v337 = vadd.s32 %v333, 32
    %v338 = vadd.s32 %v333, 40
    %v339 = vadd.s32 %v333, 48
    %v340 = vadd.s32 %v333, 56
    %v341 = vadd.s32 %v333, 64
    %v342 = vadd.s32 %v333, 72
    %v343 = vadd.s32 %v333, 80
    %v344 = vadd.s32 %v333, 88
    %v345 = vadd.s32 %v333, 96
    %v346 = vadd.s32 %v333, 104
    %v347 = vadd.s32 %v333, 112
    %v348 = vadd.s32 %v333, 120
    %v349 = vstv %s88
    %v350 = vadd.s32 %v333, %v349
    %v351 = vadd.s32 %v334, %v349
    %v352 = vadd.s32 %v335, %v349
    %v353 = vadd.s32 %v336, %v349
    %v354 = vadd.s32 %v337, %v349
    %v355 = vadd.s32 %v338, %v349
    %v356 = vadd.s32 %v339, %v349
    %v357 = vadd.s32 %v340, %v349
    %v358 = vadd.s32 %v341, %v349
    %v359 = vadd.s32 %v342, %v349
    %v360 = vadd.s32 %v343, %v349
    %v361 = vadd.s32 %v344, %v349
    %v362 = vadd.s32 %v345, %v349
    %v363 = vadd.s32 %v346, %v349
    %v364 = vadd.s32 %v347, %v349
    %v365 = vadd.s32 %v348, %v349
    %vm366 = vcmp.lt.s32.totalorder %v331, 16
    %vm367 = vcmp.eq.s32.totalorder %v350, %v331
    %vm368 = vcmp.eq.s32.totalorder %v351, %v331
    %vm369 = vcmp.eq.s32.totalorder %v352, %v331
    %vm370 = vcmp.eq.s32.totalorder %v353, %v331
    %vm371 = vcmp.eq.s32.totalorder %v354, %v331
    %vm372 = vcmp.eq.s32.totalorder %v355, %v331
    %vm373 = vcmp.eq.s32.totalorder %v356, %v331
    %vm374 = vcmp.eq.s32.totalorder %v357, %v331
    %vm375 = vcmp.eq.s32.totalorder %v358, %v331
    %vm376 = vcmp.eq.s32.totalorder %v359, %v331
    %vm377 = vcmp.eq.s32.totalorder %v360, %v331
    %vm378 = vcmp.eq.s32.totalorder %v361, %v331
    %vm379 = vcmp.eq.s32.totalorder %v362, %v331
    %vm380 = vcmp.eq.s32.totalorder %v363, %v331
    %vm381 = vcmp.eq.s32.totalorder %v364, %v331
    %vm382 = vcmp.eq.s32.totalorder %v365, %v331
    %v383 = vsel %vm366, %v314, -1e+30
    %v384 = vsel %vm366, %v315, -1e+30
    %v385 = vsel %vm366, %v316, -1e+30
    %v386 = vsel %vm366, %v317, -1e+30
    %v387 = vsel %vm366, %v318, -1e+30
    %v388 = vsel %vm366, %v319, -1e+30
    %v389 = vsel %vm366, %v320, -1e+30
    %v390 = vsel %vm366, %v321, -1e+30
    %v391 = vsel %vm366, %v322, -1e+30
    %v392 = vsel %vm366, %v323, -1e+30
    %v393 = vsel %vm366, %v324, -1e+30
    %v394 = vsel %vm366, %v325, -1e+30
    %v395 = vsel %vm366, %v326, -1e+30
    %v396 = vsel %vm366, %v327, -1e+30
    %v397 = vsel %vm366, %v328, -1e+30
    %v398 = vsel %vm366, %v329, -1e+30
    %399 = vmax.xlane.f32.xlu0 %v383
    %v400 = vpop.xlane.xlu0 %399
    %401 = vmax.xlane.f32.xlu0 %v384
    %v402 = vpop.xlane.xlu0 %401
    %403 = vmax.xlane.f32.xlu0 %v385
    %v404 = vpop.xlane.xlu0 %403
    %405 = vmax.xlane.f32.xlu0 %v386
    %v406 = vpop.xlane.xlu0 %405
    %407 = vmax.xlane.f32.xlu0 %v387
    %v408 = vpop.xlane.xlu0 %407
    %409 = vmax.xlane.f32.xlu0 %v388
    %v410 = vpop.xlane.xlu0 %409
    %411 = vmax.xlane.f32.xlu0 %v389
    %v412 = vpop.xlane.xlu0 %411
    %413 = vmax.xlane.f32.xlu0 %v390
    %v414 = vpop.xlane.xlu0 %413
    %415 = vmax.xlane.f32.xlu0 %v391
    %v416 = vpop.xlane.xlu0 %415
    %417 = vmax.xlane.f32.xlu0 %v392
    %v418 = vpop.xlane.xlu0 %417
    %419 = vmax.xlane.f32.xlu0 %v393
    %v420 = vpop.xlane.xlu0 %419
    %421 = vmax.xlane.f32.xlu0 %v394
    %v422 = vpop.xlane.xlu0 %421
    %423 = vmax.xlane.f32.xlu0 %v395
    %v424 = vpop.xlane.xlu0 %423
    %425 = vmax.xlane.f32.xlu0 %v396
    %v426 = vpop.xlane.xlu0 %425
    %427 = vmax.xlane.f32.xlu0 %v397
    %v428 = vpop.xlane.xlu0 %427
    %429 = vmax.xlane.f32.xlu0 %v398
    %v430 = vpop.xlane.xlu0 %429
    %v431 = vsub.f32 %v314, %v400
    %v432 = vsub.f32 %v315, %v402
    %v433 = vsub.f32 %v316, %v404
    %v434 = vsub.f32 %v317, %v406
    %v435 = vsub.f32 %v318, %v408
    %v436 = vsub.f32 %v319, %v410
    %v437 = vsub.f32 %v320, %v412
    %v438 = vsub.f32 %v321, %v414
    %v439 = vsub.f32 %v322, %v416
    %v440 = vsub.f32 %v323, %v418
    %v441 = vsub.f32 %v324, %v420
    %v442 = vsub.f32 %v325, %v422
    %v443 = vsub.f32 %v326, %v424
    %v444 = vsub.f32 %v327, %v426
    %v445 = vsub.f32 %v328, %v428
    %v446 = vsub.f32 %v329, %v430
    %vm447 = vmxor %vm367, 1
    %vm448 = vmxor %vm368, 1
    %vm449 = vmxor %vm369, 1
    %vm450 = vmxor %vm370, 1
    %vm451 = vmxor %vm371, 1
    %vm452 = vmxor %vm372, 1
    %vm453 = vmxor %vm373, 1
    %vm454 = vmxor %vm374, 1
    %vm455 = vmxor %vm375, 1
    %vm456 = vmxor %vm376, 1
    %vm457 = vmxor %vm377, 1
    %vm458 = vmxor %vm378, 1
    %vm459 = vmxor %vm379, 1
    %vm460 = vmxor %vm380, 1
    %vm461 = vmxor %vm381, 1
    %vm462 = vmxor %vm382, 1
    %vm463 = vmand %vm366, %vm447
    %vm464 = vmand %vm366, %vm448
    %vm465 = vmand %vm366, %vm449
    %vm466 = vmand %vm366, %vm450
    %vm467 = vmand %vm366, %vm451
    %vm468 = vmand %vm366, %vm452
    %vm469 = vmand %vm366, %vm453
    %vm470 = vmand %vm366, %vm454
    %vm471 = vmand %vm366, %vm455
    %vm472 = vmand %vm366, %vm456
    %vm473 = vmand %vm366, %vm457
    %vm474 = vmand %vm366, %vm458
    %vm475 = vmand %vm366, %vm459
    %vm476 = vmand %vm366, %vm460
    %vm477 = vmand %vm366, %vm461
    %vm478 = vmand %vm366, %vm462
    %v479 = vsel %vm463, %v431, -1e+30
    %v480 = vsel %vm464, %v432, -1e+30
    %v481 = vsel %vm465, %v433, -1e+30
    %v482 = vsel %vm466, %v434, -1e+30
    %v483 = vsel %vm467, %v435, -1e+30
    %v484 = vsel %vm468, %v436, -1e+30
    %v485 = vsel %vm469, %v437, -1e+30
    %v486 = vsel %vm470, %v438, -1e+30
    %v487 = vsel %vm471, %v439, -1e+30
    %v488 = vsel %vm472, %v440, -1e+30
    %v489 = vsel %vm473, %v441, -1e+30
    %v490 = vsel %vm474, %v442, -1e+30
    %v491 = vsel %vm475, %v443, -1e+30
    %v492 = vsel %vm476, %v444, -1e+30
    %v493 = vsel %vm477, %v445, -1e+30
    %v494 = vsel %vm478, %v446, -1e+30
    %v495 = vmul.f32 %v479, 1.442695
    %v496 = vpow.pop %v495
    %v497 = vmul.f32 %v480, 1.442695
    %v498 = vpow.pop %v497
    %v499 = vmul.f32 %v481, 1.442695
    %v500 = vpow.pop %v499
    %v501 = vmul.f32 %v482, 1.442695
    %v502 = vpow.pop %v501
    %v503 = vmul.f32 %v483, 1.442695
    %v504 = vpow.pop %v503
    %v505 = vmul.f32 %v484, 1.442695
    %v506 = vpow.pop %v505
    %v507 = vmul.f32 %v485, 1.442695
    %v508 = vpow.pop %v507
    %v509 = vmul.f32 %v486, 1.442695
    %v510 = vpow.pop %v509
    %v511 = vmul.f32 %v487, 1.442695
    %v512 = vpow.pop %v511
    %v513 = vmul.f32 %v488, 1.442695
    %v514 = vpow.pop %v513
    %v515 = vmul.f32 %v489, 1.442695
    %v516 = vpow.pop %v515
    %v517 = vmul.f32 %v490, 1.442695
    %v518 = vpow.pop %v517
    %v519 = vmul.f32 %v491, 1.442695
    %v520 = vpow.pop %v519
    %v521 = vmul.f32 %v492, 1.442695
    %v522 = vpow.pop %v521
    %v523 = vmul.f32 %v493, 1.442695
    %v524 = vpow.pop %v523
    %v525 = vmul.f32 %v494, 1.442695
    %v526 = vpow.pop %v525
    %527 = vadd.xlane.f32.xlu0 %v496
    %v528 = vpop.xlane.xlu0 %527
    %529 = vadd.xlane.f32.xlu0 %v498
    %v530 = vpop.xlane.xlu0 %529
    %531 = vadd.xlane.f32.xlu0 %v500
    %v532 = vpop.xlane.xlu0 %531
    %533 = vadd.xlane.f32.xlu0 %v502
    %v534 = vpop.xlane.xlu0 %533
    %535 = vadd.xlane.f32.xlu0 %v504
    %v536 = vpop.xlane.xlu0 %535
    %537 = vadd.xlane.f32.xlu0 %v506
    %v538 = vpop.xlane.xlu0 %537
    %539 = vadd.xlane.f32.xlu0 %v508
    %v540 = vpop.xlane.xlu0 %539
    %541 = vadd.xlane.f32.xlu0 %v510
    %v542 = vpop.xlane.xlu0 %541
    %543 = vadd.xlane.f32.xlu0 %v512
    %v544 = vpop.xlane.xlu0 %543
    %545 = vadd.xlane.f32.xlu0 %v514
    %v546 = vpop.xlane.xlu0 %545
    %547 = vadd.xlane.f32.xlu0 %v516
    %v548 = vpop.xlane.xlu0 %547
    %549 = vadd.xlane.f32.xlu0 %v518
    %v550 = vpop.xlane.xlu0 %549
    %551 = vadd.xlane.f32.xlu0 %v520
    %v552 = vpop.xlane.xlu0 %551
    %553 = vadd.xlane.f32.xlu0 %v522
    %v554 = vpop.xlane.xlu0 %553
    %555 = vadd.xlane.f32.xlu0 %v524
    %v556 = vpop.xlane.xlu0 %555
    %557 = vadd.xlane.f32.xlu0 %v526
    %v558 = vpop.xlane.xlu0 %557
    %v559 = vlog2.pop %v528
    %v560 = vmul.f32 %v559, 0.6931472
    %v561 = vlog2.pop %v530
    %v562 = vmul.f32 %v561, 0.6931472
    %v563 = vlog2.pop %v532
    %v564 = vmul.f32 %v563, 0.6931472
    %v565 = vlog2.pop %v534
    %v566 = vmul.f32 %v565, 0.6931472
    %v567 = vlog2.pop %v536
    %v568 = vmul.f32 %v567, 0.6931472
    %v569 = vlog2.pop %v538
    %v570 = vmul.f32 %v569, 0.6931472
    %v571 = vlog2.pop %v540
    %v572 = vmul.f32 %v571, 0.6931472
    %v573 = vlog2.pop %v542
    %v574 = vmul.f32 %v573, 0.6931472
    %v575 = vlog2.pop %v544
    %v576 = vmul.f32 %v575, 0.6931472
    %v577 = vlog2.pop %v546
    %v578 = vmul.f32 %v577, 0.6931472
    %v579 = vlog2.pop %v548
    %v580 = vmul.f32 %v579, 0.6931472
    %v581 = vlog2.pop %v550
    %v582 = vmul.f32 %v581, 0.6931472
    %v583 = vlog2.pop %v552
    %v584 = vmul.f32 %v583, 0.6931472
    %v585 = vlog2.pop %v554
    %v586 = vmul.f32 %v585, 0.6931472
    %v587 = vlog2.pop %v556
    %v588 = vmul.f32 %v587, 0.6931472
    %v589 = vlog2.pop %v558
    %v590 = vmul.f32 %v589, 0.6931472
    %v591 = vsub.f32 %v431, %v560
    %v592 = vsub.f32 %v432, %v562
    %v593 = vsub.f32 %v433, %v564
    %v594 = vsub.f32 %v434, %v566
    %v595 = vsub.f32 %v435, %v568
    %v596 = vsub.f32 %v436, %v570
    %v597 = vsub.f32 %v437, %v572
    %v598 = vsub.f32 %v438, %v574
    %v599 = vsub.f32 %v439, %v576
    %v600 = vsub.f32 %v440, %v578
    %v601 = vsub.f32 %v441, %v580
    %v602 = vsub.f32 %v442, %v582
    %v603 = vsub.f32 %v443, %v584
    %v604 = vsub.f32 %v444, %v586
    %v605 = vsub.f32 %v445, %v588
    %v606 = vsub.f32 %v446, %v590
    %v607 = vld [vmem:[#allocation7] sm:$0xff]
    %v608 = vld [vmem:[#allocation7 + $0x8] sm:$0xff]
    %v609 = vld [vmem:[#allocation7 + $0x10] sm:$0xff]
    %v610 = vld [vmem:[#allocation7 + $0x18] sm:$0xff]
    %v611 = vld [vmem:[#allocation7 + $0x20] sm:$0xff]
    %v612 = vld [vmem:[#allocation7 + $0x28] sm:$0xff]
    %v613 = vld [vmem:[#allocation7 + $0x30] sm:$0xff]
    %v614 = vld [vmem:[#allocation7 + $0x38] sm:$0xff]
    %v615 = vld [vmem:[#allocation7 + $0x40] sm:$0xff]
    %v616 = vld [vmem:[#allocation7 + $0x48] sm:$0xff]
    %v617 = vld [vmem:[#allocation7 + $0x50] sm:$0xff]
    %v618 = vld [vmem:[#allocation7 + $0x58] sm:$0xff]
    %v619 = vld [vmem:[#allocation7 + $0x60] sm:$0xff]
    %v620 = vld [vmem:[#allocation7 + $0x68] sm:$0xff]
    %v621 = vld [vmem:[#allocation7 + $0x70] sm:$0xff]
    %v622 = vld [vmem:[#allocation7 + $0x78] sm:$0xff]
    %v623 = vld [vmem:[#allocation8] sm:$0x1]
    %624 = vset.pattern.permute.xlu0 0
    %625 = vperm.xlu0 %624, %v607
    %v626 = vpop.permute.xlu0 %625
    %627 = vset.pattern.permute.xlu0 0
    %628 = vperm.xlu0 %627, %v608
    %v629 = vpop.permute.xlu0 %628
    %630 = vset.pattern.permute.xlu0 0
    %631 = vperm.xlu0 %630, %v609
    %v632 = vpop.permute.xlu0 %631
    %633 = vset.pattern.permute.xlu0 0
    %634 = vperm.xlu0 %633, %v610
    %v635 = vpop.permute.xlu0 %634
    %636 = vset.pattern.permute.xlu0 0
    %637 = vperm.xlu0 %636, %v611
    %v638 = vpop.permute.xlu0 %637
    %639 = vset.pattern.permute.xlu0 0
    %640 = vperm.xlu0 %639, %v612
    %v641 = vpop.permute.xlu0 %640
    %642 = vset.pattern.permute.xlu0 0
    %643 = vperm.xlu0 %642, %v613
    %v644 = vpop.permute.xlu0 %643
    %645 = vset.pattern.permute.xlu0 0
    %646 = vperm.xlu0 %645, %v614
    %v647 = vpop.permute.xlu0 %646
    %648 = vset.pattern.permute.xlu0 0
    %649 = vperm.xlu0 %648, %v615
    %v650 = vpop.permute.xlu0 %649
    %651 = vset.pattern.permute.xlu0 0
    %652 = vperm.xlu0 %651, %v616
    %v653 = vpop.permute.xlu0 %652
    %654 = vset.pattern.permute.xlu0 0
    %655 = vperm.xlu0 %654, %v617
    %v656 = vpop.permute.xlu0 %655
    %657 = vset.pattern.permute.xlu0 0
    %658 = vperm.xlu0 %657, %v618
    %v659 = vpop.permute.xlu0 %658
    %660 = vset.pattern.permute.xlu0 0
    %661 = vperm.xlu0 %660, %v619
    %v662 = vpop.permute.xlu0 %661
    %663 = vset.pattern.permute.xlu0 0
    %664 = vperm.xlu0 %663, %v620
    %v665 = vpop.permute.xlu0 %664
    %666 = vset.pattern.permute.xlu0 0
    %667 = vperm.xlu0 %666, %v621
    %v668 = vpop.permute.xlu0 %667
    %669 = vset.pattern.permute.xlu0 0
    %670 = vperm.xlu0 %669, %v622
    %v671 = vpop.permute.xlu0 %670
    %v672 = vlaneseq
    %v673 = vshrl.u32 %v672, 7
    %v674 = vsub.s32 0, %v673
    %v675 = vrot.slane %v623, %v674
    %vm676 = vcmp.eq.s32.totalorder %v626, %v675
    %vm677 = vcmp.eq.s32.totalorder %v629, %v675
    %vm678 = vcmp.eq.s32.totalorder %v632, %v675
    %vm679 = vcmp.eq.s32.totalorder %v635, %v675
    %vm680 = vcmp.eq.s32.totalorder %v638, %v675
    %vm681 = vcmp.eq.s32.totalorder %v641, %v675
    %vm682 = vcmp.eq.s32.totalorder %v644, %v675
    %vm683 = vcmp.eq.s32.totalorder %v647, %v675
    %vm684 = vcmp.eq.s32.totalorder %v650, %v675
    %vm685 = vcmp.eq.s32.totalorder %v653, %v675
    %vm686 = vcmp.eq.s32.totalorder %v656, %v675
    %vm687 = vcmp.eq.s32.totalorder %v659, %v675
    %vm688 = vcmp.eq.s32.totalorder %v662, %v675
    %vm689 = vcmp.eq.s32.totalorder %v665, %v675
    %vm690 = vcmp.eq.s32.totalorder %v668, %v675
    %vm691 = vcmp.eq.s32.totalorder %v671, %v675
    %vm692 = vmand %vm676, %vm447
    %vm693 = vmand %vm677, %vm448
    %vm694 = vmand %vm678, %vm449
    %vm695 = vmand %vm679, %vm450
    %vm696 = vmand %vm680, %vm451
    %vm697 = vmand %vm681, %vm452
    %vm698 = vmand %vm682, %vm453
    %vm699 = vmand %vm683, %vm454
    %vm700 = vmand %vm684, %vm455
    %vm701 = vmand %vm685, %vm456
    %vm702 = vmand %vm686, %vm457
    %vm703 = vmand %vm687, %vm458
    %vm704 = vmand %vm688, %vm459
    %vm705 = vmand %vm689, %vm460
    %vm706 = vmand %vm690, %vm461
    %vm707 = vmand %vm691, %vm462
    %vm708 = vmand %vm692, %vm366
    %vm709 = vmand %vm693, %vm366
    %vm710 = vmand %vm694, %vm366
    %vm711 = vmand %vm695, %vm366
    %vm712 = vmand %vm696, %vm366
    %vm713 = vmand %vm697, %vm366
    %vm714 = vmand %vm698, %vm366
    %vm715 = vmand %vm699, %vm366
    %vm716 = vmand %vm700, %vm366
    %vm717 = vmand %vm701, %vm366
    %vm718 = vmand %vm702, %vm366
    %vm719 = vmand %vm703, %vm366
    %vm720 = vmand %vm704, %vm366
    %vm721 = vmand %vm705, %vm366
    %vm722 = vmand %vm706, %vm366
    %vm723 = vmand %vm707, %vm366
    %v724 = vsel %vm708, %v591, 0.0
    %v725 = vsel %vm709, %v592, 0.0
    %v726 = vsel %vm710, %v593, 0.0
    %v727 = vsel %vm711, %v594, 0.0
    %v728 = vsel %vm712, %v595, 0.0
    %v729 = vsel %vm713, %v596, 0.0
    %v730 = vsel %vm714, %v597, 0.0
    %v731 = vsel %vm715, %v598, 0.0
    %v732 = vsel %vm716, %v599, 0.0
    %v733 = vsel %vm717, %v600, 0.0
    %v734 = vsel %vm718, %v601, 0.0
    %v735 = vsel %vm719, %v602, 0.0
    %v736 = vsel %vm720, %v603, 0.0
    %v737 = vsel %vm721, %v604, 0.0
    %v738 = vsel %vm722, %v605, 0.0
    %v739 = vsel %vm723, %v606, 0.0
    %740 = vadd.xlane.f32.xlu0 %v724
    %v741 = vpop.xlane.xlu0 %740
    %742 = vadd.xlane.f32.xlu0 %v725
    %v743 = vpop.xlane.xlu0 %742
    %744 = vadd.xlane.f32.xlu0 %v726
    %v745 = vpop.xlane.xlu0 %744
    %746 = vadd.xlane.f32.xlu0 %v727
    %v747 = vpop.xlane.xlu0 %746
    %748 = vadd.xlane.f32.xlu0 %v728
    %v749 = vpop.xlane.xlu0 %748
    %750 = vadd.xlane.f32.xlu0 %v729
    %v751 = vpop.xlane.xlu0 %750
    %752 = vadd.xlane.f32.xlu0 %v730
    %v753 = vpop.xlane.xlu0 %752
    %754 = vadd.xlane.f32.xlu0 %v731
    %v755 = vpop.xlane.xlu0 %754
    %756 = vadd.xlane.f32.xlu0 %v732
    %v757 = vpop.xlane.xlu0 %756
    %758 = vadd.xlane.f32.xlu0 %v733
    %v759 = vpop.xlane.xlu0 %758
    %760 = vadd.xlane.f32.xlu0 %v734
    %v761 = vpop.xlane.xlu0 %760
    %762 = vadd.xlane.f32.xlu0 %v735
    %v763 = vpop.xlane.xlu0 %762
    %764 = vadd.xlane.f32.xlu0 %v736
    %v765 = vpop.xlane.xlu0 %764
    %766 = vadd.xlane.f32.xlu0 %v737
    %v767 = vpop.xlane.xlu0 %766
    %768 = vadd.xlane.f32.xlu0 %v738
    %v769 = vpop.xlane.xlu0 %768
    %770 = vadd.xlane.f32.xlu0 %v739
    %v771 = vpop.xlane.xlu0 %770
    %v772 = vld [vmem:[#allocation10] sm:$0xff]
    %v773 = vld [vmem:[#allocation10 + $0x8] sm:$0xff]
    %v774 = vld [vmem:[#allocation10 + $0x10] sm:$0xff]
    %v775 = vld [vmem:[#allocation10 + $0x18] sm:$0xff]
    %v776 = vld [vmem:[#allocation10 + $0x20] sm:$0xff]
    %v777 = vld [vmem:[#allocation10 + $0x28] sm:$0xff]
    %v778 = vld [vmem:[#allocation10 + $0x30] sm:$0xff]
    %v779 = vld [vmem:[#allocation10 + $0x38] sm:$0xff]
    %v780 = vld [vmem:[#allocation10 + $0x40] sm:$0xff]
    %v781 = vld [vmem:[#allocation10 + $0x48] sm:$0xff]
    %v782 = vld [vmem:[#allocation10 + $0x50] sm:$0xff]
    %v783 = vld [vmem:[#allocation10 + $0x58] sm:$0xff]
    %v784 = vld [vmem:[#allocation10 + $0x60] sm:$0xff]
    %v785 = vld [vmem:[#allocation10 + $0x68] sm:$0xff]
    %v786 = vld [vmem:[#allocation10 + $0x70] sm:$0xff]
    %v787 = vld [vmem:[#allocation10 + $0x78] sm:$0xff]
    %v788 = vmul.f32 %v741, %v772
    %v789 = vmul.f32 %v743, %v773
    %v790 = vmul.f32 %v745, %v774
    %v791 = vmul.f32 %v747, %v775
    %v792 = vmul.f32 %v749, %v776
    %v793 = vmul.f32 %v751, %v777
    %v794 = vmul.f32 %v753, %v778
    %v795 = vmul.f32 %v755, %v779
    %v796 = vmul.f32 %v757, %v780
    %v797 = vmul.f32 %v759, %v781
    %v798 = vmul.f32 %v761, %v782
    %v799 = vmul.f32 %v763, %v783
    %v800 = vmul.f32 %v765, %v784
    %v801 = vmul.f32 %v767, %v785
    %v802 = vmul.f32 %v769, %v786
    %v803 = vmul.f32 %v771, %v787
    %v804 = vmul.f32 %v788, -1.0
    %v805 = vmul.f32 %v789, -1.0
    %v806 = vmul.f32 %v790, -1.0
    %v807 = vmul.f32 %v791, -1.0
    %v808 = vmul.f32 %v792, -1.0
    %v809 = vmul.f32 %v793, -1.0
    %v810 = vmul.f32 %v794, -1.0
    %v811 = vmul.f32 %v795, -1.0
    %v812 = vmul.f32 %v796, -1.0
    %v813 = vmul.f32 %v797, -1.0
    %v814 = vmul.f32 %v798, -1.0
    %v815 = vmul.f32 %v799, -1.0
    %v816 = vmul.f32 %v800, -1.0
    %v817 = vmul.f32 %v801, -1.0
    %v818 = vmul.f32 %v802, -1.0
    %v819 = vmul.f32 %v803, -1.0
    %vm820 = vcmp.lt.s32.totalorder %v350, 16
    %vm821 = vcmp.lt.s32.totalorder %v351, 16
    %vm822 = vcmp.lt.s32.totalorder %v352, 16
    %vm823 = vcmp.lt.s32.totalorder %v353, 16
    %vm824 = vcmp.lt.s32.totalorder %v354, 16
    %vm825 = vcmp.lt.s32.totalorder %v355, 16
    %vm826 = vcmp.lt.s32.totalorder %v356, 16
    %vm827 = vcmp.lt.s32.totalorder %v357, 16
    %vm828 = vcmp.lt.s32.totalorder %v358, 16
    %vm829 = vcmp.lt.s32.totalorder %v359, 16
    %vm830 = vcmp.lt.s32.totalorder %v360, 16
    %vm831 = vcmp.lt.s32.totalorder %v361, 16
    %vm832 = vcmp.lt.s32.totalorder %v362, 16
    %vm833 = vcmp.lt.s32.totalorder %v363, 16
    %vm834 = vcmp.lt.s32.totalorder %v364, 16
    %vm835 = vcmp.lt.s32.totalorder %v365, 16
    %v836 = vsel %vm820, %v804, 0.0
    %v837 = vsel %vm821, %v805, 0.0
    %v838 = vsel %vm822, %v806, 0.0
    %v839 = vsel %vm823, %v807, 0.0
    %v840 = vsel %vm824, %v808, 0.0
    %v841 = vsel %vm825, %v809, 0.0
    %v842 = vsel %vm826, %v810, 0.0
    %v843 = vsel %vm827, %v811, 0.0
    %v844 = vsel %vm828, %v812, 0.0
    %v845 = vsel %vm829, %v813, 0.0
    %v846 = vsel %vm830, %v814, 0.0
    %v847 = vsel %vm831, %v815, 0.0
    %v848 = vsel %vm832, %v816, 0.0
    %v849 = vsel %vm833, %v817, 0.0
    %v850 = vsel %vm834, %v818, 0.0
    %v851 = vsel %vm835, %v819, 0.0
    %vm852 = vcmask 7168
    %853 = vst.msk [vmem:[#allocation11] sm:$0xff] %vm852, %v836
    %854 = vst.msk [vmem:[#allocation11 + $0x8] sm:$0xff] %vm852, %v837
    %855 = vst.msk [vmem:[#allocation11 + $0x10] sm:$0xff] %vm852, %v838
    %856 = vst.msk [vmem:[#allocation11 + $0x18] sm:$0xff] %vm852, %v839
    %857 = vst.msk [vmem:[#allocation11 + $0x20] sm:$0xff] %vm852, %v840
    %858 = vst.msk [vmem:[#allocation11 + $0x28] sm:$0xff] %vm852, %v841
    %859 = vst.msk [vmem:[#allocation11 + $0x30] sm:$0xff] %vm852, %v842
    %860 = vst.msk [vmem:[#allocation11 + $0x38] sm:$0xff] %vm852, %v843
    %861 = vst.msk [vmem:[#allocation11 + $0x40] sm:$0xff] %vm852, %v844
    %862 = vst.msk [vmem:[#allocation11 + $0x48] sm:$0xff] %vm852, %v845
    %863 = vst.msk [vmem:[#allocation11 + $0x50] sm:$0xff] %vm852, %v846
    %864 = vst.msk [vmem:[#allocation11 + $0x58] sm:$0xff] %vm852, %v847
    %865 = vst.msk [vmem:[#allocation11 + $0x60] sm:$0xff] %vm852, %v848
    %866 = vst.msk [vmem:[#allocation11 + $0x68] sm:$0xff] %vm852, %v849
    %867 = vst.msk [vmem:[#allocation11 + $0x70] sm:$0xff] %vm852, %v850
    %868 = vst.msk [vmem:[#allocation11 + $0x78] sm:$0xff] %vm852, %v851
    // Predicated region
    $region42: #{tpu_custom_call.1} parent=1 // pred_check
      _
    $region43: #{tpu_custom_call.1} parent=1 // pred_check_branch
      %870 = sbr.rel (0) target = $region45
    $region44: #{tpu_custom_call.1} parent=1 // pred_region
      %s872 = ssub.s32 2048, 2048
      %873 = vsyncadd [#allocation4], %s872
      %s874 = sshll.u32 [#allocation11], 4
      %s875 = int_to_ptr.vmem [resolvable:$true] %s874
      %880 = dma.vmem_to_hbm [thread:$0]  %s875, 2048, %s5, [#allocation4], 128, 128, 8
    $region45: #{tpu_custom_call.1} parent=1 // pred_fallthru
      _
    // Predicated region
    $region46: #{tpu_custom_call.1} parent=1 // pred_check
      _
    $region47: #{tpu_custom_call.1} parent=1 // pred_check_branch
      %882 = sbr.rel (0) target = $region49
    $region48: #{tpu_custom_call.1} parent=1 // pred_region
      %883 = dma.done [#allocation4], 2048
    $region49: #{tpu_custom_call.1} parent=1 // pred_fallthru
      _
    %884 = vsyncpa [#allocation3], 1
    %885 = vsyncpa [#allocation6], 1
    %886 = vsyncpa [#allocation9], 1
    %887 = vsyncpa [#allocation4], 1

</llo_original>
